<compile_context>
chip_gen: v7x
topology: tpu7x:2x2x1
jax: 0.10.0
libtpu: 0.0.40
codegen_flags: <defaults>
</compile_context>

<pallas_src>
import numpy as np

import jax
import jax.numpy as jnp
from jax import lax
from jax.experimental import pallas as pl
from jax.experimental.pallas import tpu as pltpu


def _round_up(n, m):
    return ((n + m - 1) // m) * m


def _vmem_tile_bytes(rows, cols, itemsize=4):
    """VMEM footprint of a (rows, cols) buffer after (8, 128) layout tiling."""
    return _round_up(max(rows, 1), 8) * _round_up(max(cols, 1), 128) * itemsize


def tree_kernel(x_ref, w_in_ref, b_in_ref, s_ref, thr_ref, w_leaf_ref, outT_ref):
    """One batch tile; the batch lives on the 128-lane axis of every intermediate.

    x_ref:      (TILE_B, D)          natural input layout (no wrapper relayout)
    w_in_ref:   (N_int_p, D)         inner-node weights (ones-column removed)
    b_in_ref:   (N_int_p, 1)         inner-node bias (the ones-column weights)
    s_ref:      (N_leaf_p, N_int_p)  static +/-1 routing matrix (bf16)
    thr_ref:    (N_leaf_p, 1)        per-leaf threshold = depth - 0.5 - c
    w_leaf_ref: (out_dim, N_leaf_p)  leaf weights
    outT_ref:   (out_dim, TILE_B)    output tile, transposed (lane-dense)
    """
    # d^T = W_in @ x^T, expressed as an NT contraction on D so x can stay in
    # its natural (B, D) layout; the small in-VMEM operand transpose runs on
    # the otherwise-idle XLU, not through HBM.
    d = lax.dot_general(w_in_ref[...], x_ref[...],
                        dimension_numbers=(((1,), (1,)), ((), ())),
                        preferred_element_type=jnp.float32) + b_in_ref[...]
    # Hard decision: exactly {0, 1}, so the bf16 routing matmul below is exact.
    p = (d > 0.0).astype(jnp.bfloat16)                       # (N_int_p, TILE_B)

    # Routing as one MXU matmul: match[leaf] + c counts how many layers of the
    # leaf's root-to-leaf path agree with the hard decisions; the leaf is
    # active iff all `depth` layers agree, i.e. match > depth - 0.5 - c.
    match = jnp.dot(s_ref[...], p, preferred_element_type=jnp.float32)
    mu = (match > thr_ref[...]).astype(jnp.float32)          # (N_leaf_p, TILE_B)

    # y^T = W_leaf @ mu^T
    outT_ref[...] = jnp.dot(w_leaf_ref[...], mu, preferred_element_type=jnp.float32)


def _routing_tables(depth, n_int_pad, n_leaf_pad):
    """Static routing matrix S (N_leaf_p, N_int_p) and per-leaf threshold.

    For leaf l, layer L: node = (2^L - 1) + (l >> (depth - L)),
    bit = (l >> (depth - L - 1)) & 1; path factor is p[node] if bit == 0 else
    (1 - p[node]).  Hence S[l, node] = +1 / -1 and the number of agreeing
    layers is S @ p + c with c = sum(bits); a leaf fires iff that equals depth,
    i.e. S @ p > depth - 0.5 - c.  Padded leaves get a huge threshold.
    """
    n_leaf = 2 ** depth
    s = np.zeros((n_leaf_pad, n_int_pad), np.float32)
    thr = np.full((n_leaf_pad, 1), 1e9, np.float32)          # padded leaves never fire
    for leaf in range(n_leaf):
        right_turns = 0.0
        for layer in range(depth):
            node = (2 ** layer - 1) + (leaf >> (depth - layer))
            bit = (leaf >> (depth - layer - 1)) & 1
            s[leaf, node] = 1.0 if bit == 0 else -1.0
            right_turns += float(bit)
        thr[leaf, 0] = depth - 0.5 - right_turns
    return jnp.asarray(s, jnp.bfloat16), jnp.asarray(thr, jnp.float32)


def _scoped_vmem_cap():
    """Scoped-VMEM ceiling we are willing to request (v7x-safe)."""
    try:
        phys = int(getattr(pltpu.get_tpu_info(), "vmem_capacity_bytes", 0)) or (64 << 20)
    except Exception:
        phys = 64 << 20                                      # conservative: v7x per-TC
    return min((phys * 3) // 4, 48 << 20)


def _pick_tile_b(batch, d_in, out_dim, n_int_p, n_leaf_p, x_budget, requested):
    b_cap = _round_up(batch, 128)
    if requested is not None:
        return max(128, min(_round_up(requested, 128), b_cap))
    # VMEM bytes per unit of tile_b (x + out double buffers + intermediates,
    # with lane/sublane padding of the VMEM layout accounted for).
    per_col = 4 * (2 * _round_up(d_in, 128)                  # x double-buffer
                   + 2 * _round_up(out_dim, 8)               # out double-buffer
                   + 2 * n_int_p + 2 * n_leaf_p)             # d, p, match, mu
    t = min(b_cap, max(128, x_budget // per_col), 8192)
    # Keep >= ~8 grid steps for large batches so both v7x TCs get work.
    if b_cap >= 8 * 128:
        t = min(t, max(128, b_cap // 8))
    return max(128, (t // 128) * 128)


def neural_decision_tree_forward(x, w_inner, w_leaf, depth, tile_b=None,
                                 stream_x_bf16=False):
    """Pallas TPU implementation of NeuralDecisionTree.forward(X).

    x:       (B, ...) flattened to (B, input_dim)
    w_inner: (2^depth - 1, input_dim + 1)  nn.Linear(input_dim+1, 2^depth-1, bias=False).weight
    w_leaf:  (output_dim, 2^depth)         nn.Linear(2^depth, output_dim, bias=False).weight
    stream_x_bf16: stream x / W_in in bf16 for the first matmul (f32 accumulate).
        Halves the dominant HBM read but is NOT bit-exact for samples with
        |decision| near 0 (hard threshold may flip), so off by default.
    """
    batch = x.shape[0]
    out_dim = w_leaf.shape[0]
    n_int = 2 ** depth - 1
    n_leaf = 2 ** depth
    n_int_p = _round_up(n_int, 8)
    n_leaf_p = _round_up(n_leaf, 8)

    x_flat = x.reshape(batch, -1).astype(jnp.float32)
    d_in = x_flat.shape[1]

    # Ones-column weight becomes an explicit bias; node counts padded to x8 so
    # the (nodes, TILE_B) intermediates are clean (8, 128) vreg tiles.
    w_inner = jnp.asarray(w_inner, jnp.float32)
    w_in = jnp.zeros((n_int_p, d_in), jnp.float32).at[:n_int].set(w_inner[:, 1:])
    b_in = jnp.zeros((n_int_p, 1), jnp.float32).at[:n_int].set(w_inner[:, 0:1])
    w_leaf_p = jnp.zeros((out_dim, n_leaf_p), jnp.float32).at[:, :n_leaf].set(
        jnp.asarray(w_leaf, jnp.float32))
    s_mat, thr = _routing_tables(depth, n_int_p, n_leaf_p)

    if stream_x_bf16:
        # TODO(synk): accuracy trade-off flag; decisions with |d| ~ 0 may flip.
        x_flat = x_flat.astype(jnp.bfloat16)
        w_in = w_in.astype(jnp.bfloat16)
    x_isz = 2 if stream_x_bf16 else 4

    vmem_cap = _scoped_vmem_cap()
    tile_b = _pick_tile_b(batch, d_in, out_dim, n_int_p, n_leaf_p,
                          x_budget=vmem_cap // 3, requested=tile_b)
    grid = (pl.cdiv(batch, tile_b),)

    weights_bytes = (_vmem_tile_bytes(n_int_p, d_in, x_isz)
                     + _vmem_tile_bytes(n_int_p, 1)
                     + _vmem_tile_bytes(n_leaf_p, n_int_p, 2)
                     + _vmem_tile_bytes(n_leaf_p, 1)
                     + _vmem_tile_bytes(out_dim, n_leaf_p))
    per_step_bytes = (2 * _vmem_tile_bytes(tile_b, d_in, x_isz)    # x (double-buffered)
                      + 2 * _vmem_tile_bytes(out_dim, tile_b)      # out (double-buffered)
                      + 2 * _vmem_tile_bytes(n_int_p, tile_b)      # d, p
                      + 2 * _vmem_tile_bytes(n_leaf_p, tile_b))    # match, mu
    vmem_limit = int(min(max(2 * (per_step_bytes + 2 * weights_bytes), 8 << 20),
                         vmem_cap))

    b_work = grid[0] * tile_b
    flops = 2 * b_work * (n_int_p * d_in + n_leaf_p * n_int_p + out_dim * n_leaf_p)
    bytes_accessed = (x_isz * batch * d_in + 4 * out_dim * batch
                      + 4 * (n_int_p * (d_in + 1) + n_leaf_p + out_dim * n_leaf_p)
                      + 2 * n_leaf_p * n_int_p)

    const = lambda i: (0, 0)
    outT = pl.pallas_call(
        tree_kernel,
        out_shape=jax.ShapeDtypeStruct((out_dim, batch), jnp.float32),
        grid=grid,
        in_specs=[
            pl.BlockSpec((tile_b, d_in), lambda i: (i, 0)),    # x tile (natural layout)
            pl.BlockSpec((n_int_p, d_in), const),              # W_in     (VMEM-resident)
            pl.BlockSpec((n_int_p, 1), const),                 # bias     (VMEM-resident)
            pl.BlockSpec((n_leaf_p, n_int_p), const),          # S (bf16) (VMEM-resident)
            pl.BlockSpec((n_leaf_p, 1), const),                # threshold(VMEM-resident)
            pl.BlockSpec((out_dim, n_leaf_p), const),          # W_leaf   (VMEM-resident)
        ],
        out_specs=pl.BlockSpec((out_dim, tile_b), lambda i: (0, i)),
        compiler_params=pltpu.CompilerParams(
            dimension_semantics=("parallel",),
            vmem_limit_bytes=vmem_limit),
        cost_estimate=pl.CostEstimate(flops=int(flops), transcendentals=0,
                                      bytes_accessed=int(bytes_accessed)),
    )(x_flat, w_in, b_in, s_mat, thr, w_leaf_p)

    return outT.T                                              # (B, out_dim)


def _reference_forward(x, w_inner, w_leaf, depth):
    """Pure-JAX reference mirroring the torch code structure (interleave loop)."""
    batch = x.shape[0]
    x_flat = x.reshape(batch, -1).astype(jnp.float32)
    x_aug = jnp.concatenate([jnp.ones((batch, 1), jnp.float32), x_flat], axis=1)
    d = x_aug @ jnp.asarray(w_inner, jnp.float32).T
    p = (d > 0.0).astype(jnp.float32)
    path_prob = jnp.stack([p, 1.0 - p], axis=2)                # (B, N_int, 2)
    mu = jnp.ones((batch, 1, 1), jnp.float32)
    begin, end = 0, 1
    for layer in range(depth):
        pp = path_prob[:, begin:end, :]                        # (B, 2^layer, 2)
        mu = jnp.repeat(mu.reshape(batch, -1, 1), 2, axis=2)
        mu = mu * pp
        begin = end
        end = begin + 2 ** (layer + 1)
    mu = mu.reshape(batch, 2 ** depth)
    return mu @ jnp.asarray(w_leaf, jnp.float32).T


def _make_case(key, batch, input_dim, depth, output_dim):
    n_internal = 2 ** depth - 1
    n_leaf = 2 ** depth
    kx, kw1, kw2 = jax.random.split(key, 3)
    x = jax.random.normal(kx, (batch, input_dim), jnp.float32)
    bound_in = 1.0 / jnp.sqrt(float(input_dim + 1))
    w_inner = jax.random.uniform(
        kw1, (n_internal, input_dim + 1), jnp.float32, -bound_in, bound_in)
    bound_leaf = 1.0 / jnp.sqrt(float(n_leaf))
    w_leaf = jax.random.uniform(
        kw2, (output_dim, n_leaf), jnp.float32, -bound_leaf, bound_leaf)
    return x, w_inner, w_leaf


if __name__ == "__main__":
    key = jax.random.PRNGKey(0)
    k1, k2 = jax.random.split(key)

    # Case 1: small shapes consistent with the module (single tile, masked tail).
    depth = 3
    x, w_inner, w_leaf = _make_case(k1, batch=16, input_dim=8, depth=depth,
                                    output_dim=1)
    y = jax.block_until_ready(
        neural_decision_tree_forward(x, w_inner, w_leaf, depth))
    y_ref = _reference_forward(x, w_inner, w_leaf, depth)
    assert y.shape == (16, 1)
    assert jnp.allclose(y, y_ref, atol=1e-5, rtol=1e-5), (y, y_ref)

    # Case 2: multi-tile grid + ragged tail block + out_dim > 1.
    depth2 = 4
    x2, w_inner2, w_leaf2 = _make_case(k2, batch=300, input_dim=32,
                                       depth=depth2, output_dim=3)
    y2 = jax.block_until_ready(
        neural_decision_tree_forward(x2, w_inner2, w_leaf2, depth2, tile_b=128))
    y2_ref = _reference_forward(x2, w_inner2, w_leaf2, depth2)
    assert y2.shape == (300, 3)
    assert jnp.allclose(y2, y2_ref, atol=1e-5, rtol=1e-5), (y2, y2_ref)

    print("KERNEL_OK")
</pallas_src>

<mosaic_0001>
module attributes {stable_mosaic.version = 11 : i64} {
  func.func @tree_kernel(%arg0: i32, %arg1: memref<128x8xf32, #tpu.memory_space<vmem>>, %arg2: memref<8x8xf32, #tpu.memory_space<vmem>>, %arg3: memref<8x1xf32, #tpu.memory_space<vmem>>, %arg4: memref<8x8xbf16, #tpu.memory_space<vmem>>, %arg5: memref<8x1xf32, #tpu.memory_space<vmem>>, %arg6: memref<1x8xf32, #tpu.memory_space<vmem>>, %arg7: memref<1x128xf32, #tpu.memory_space<vmem>>) attributes {dimension_semantics = [#tpu.dimension_semantics<parallel>], iteration_bounds = array<i64: 1>, scalar_prefetch = 0 : i64, scratch_operands = 0 : i64, tpu.core_type = #tpu.core_type<tc>, window_params = [{transform_indices = @transform_0, window_bounds = array<i64: 128, 8>}, {pipeline_mode = #tpu.pipeline_mode<synchronous>, transform_indices = @transform_1, window_bounds = array<i64: 8, 8>}, {pipeline_mode = #tpu.pipeline_mode<synchronous>, transform_indices = @transform_2, window_bounds = array<i64: 8, 1>}, {pipeline_mode = #tpu.pipeline_mode<synchronous>, transform_indices = @transform_3, window_bounds = array<i64: 8, 8>}, {pipeline_mode = #tpu.pipeline_mode<synchronous>, transform_indices = @transform_4, window_bounds = array<i64: 8, 1>}, {pipeline_mode = #tpu.pipeline_mode<synchronous>, transform_indices = @transform_5, window_bounds = array<i64: 1, 8>}, {transform_indices = @transform_6, window_bounds = array<i64: 1, 128>}]} {
    %c0 = arith.constant 0 : index
    %c0_0 = arith.constant 0 : index
    %0 = vector.load %arg2[%c0, %c0_0] : memref<8x8xf32, #tpu.memory_space<vmem>>, vector<8x8xf32>
    %c0_1 = arith.constant 0 : index
    %c0_2 = arith.constant 0 : index
    %1 = vector.load %arg1[%c0_1, %c0_2] : memref<128x8xf32, #tpu.memory_space<vmem>>, vector<128x8xf32>
    %cst = arith.constant dense<0.000000e+00> : vector<8x128xf32>
    %2 = tpu.matmul %0, %1, %cst {dimension_numbers = #tpu.dot_dimension_numbers<[1], [1], [0], [0], [0, 0, 1, 0], [], []>} : vector<8x8xf32>, vector<128x8xf32>, vector<8x128xf32> -> vector<8x128xf32>
    %c0_3 = arith.constant 0 : index
    %c0_4 = arith.constant 0 : index
    %3 = vector.load %arg3[%c0_3, %c0_4] : memref<8x1xf32, #tpu.memory_space<vmem>>, vector<8x1xf32>
    %4 = vector.broadcast %3 : vector<8x1xf32> to vector<8x128xf32>
    %5 = arith.addf %2, %4 : vector<8x128xf32>
    %cst_5 = arith.constant 0.000000e+00 : f32
    %6 = vector.broadcast %cst_5 : f32 to vector<8x128xf32>
    %7 = arith.cmpf ogt, %5, %6 : vector<8x128xf32>
    %8 = arith.extui %7 : vector<8x128xi1> to vector<8x128xi32>
    %9 = arith.sitofp %8 : vector<8x128xi32> to vector<8x128xf32>
    %10 = arith.truncf %9 : vector<8x128xf32> to vector<8x128xbf16>
    %c0_6 = arith.constant 0 : index
    %c0_7 = arith.constant 0 : index
    %11 = vector.load %arg4[%c0_6, %c0_7] : memref<8x8xbf16, #tpu.memory_space<vmem>>, vector<8x8xbf16>
    %cst_8 = arith.constant dense<0.000000e+00> : vector<8x128xf32>
    %12 = tpu.matmul %11, %10, %cst_8 {dimension_numbers = #tpu.dot_dimension_numbers<[1], [0], [0], [1], [0, 0, 1, 1], [], []>} : vector<8x8xbf16>, vector<8x128xbf16>, vector<8x128xf32> -> vector<8x128xf32>
    %c0_9 = arith.constant 0 : index
    %c0_10 = arith.constant 0 : index
    %13 = vector.load %arg5[%c0_9, %c0_10] : memref<8x1xf32, #tpu.memory_space<vmem>>, vector<8x1xf32>
    %14 = vector.broadcast %13 : vector<8x1xf32> to vector<8x128xf32>
    %15 = arith.cmpf ogt, %12, %14 : vector<8x128xf32>
    %16 = arith.extui %15 : vector<8x128xi1> to vector<8x128xi32>
    %17 = arith.sitofp %16 : vector<8x128xi32> to vector<8x128xf32>
    %c0_11 = arith.constant 0 : index
    %c0_12 = arith.constant 0 : index
    %18 = vector.load %arg6[%c0_11, %c0_12] : memref<1x8xf32, #tpu.memory_space<vmem>>, vector<1x8xf32>
    %cst_13 = arith.constant dense<0.000000e+00> : vector<1x128xf32>
    %19 = tpu.matmul %18, %17, %cst_13 {dimension_numbers = #tpu.dot_dimension_numbers<[1], [0], [0], [1], [0, 0, 1, 1], [], []>} : vector<1x8xf32>, vector<8x128xf32>, vector<1x128xf32> -> vector<1x128xf32>
    %c0_14 = arith.constant 0 : index
    %c0_15 = arith.constant 0 : index
    %20 = vector.load %arg7[%c0_14, %c0_15] : memref<1x128xf32, #tpu.memory_space<vmem>>, vector<1x128xf32>
    tpu.vector_store %arg7[%c0_14, %c0_15], %19 {strides = array<i32>} : memref<1x128xf32, #tpu.memory_space<vmem>>, vector<1x128xf32>,
    return
  }
  func.func @transform_0(%arg0: i32) -> (i32, i32) {
    %c0_i32 = arith.constant 0 : i32
    %c0_i32_0 = arith.constant 0 : i32
    return %arg0, %c0_i32 : i32, i32
  }
  func.func @transform_1(%arg0: i32) -> (i32, i32) {
    %c0_i32 = arith.constant 0 : i32
    %c0_i32_0 = arith.constant 0 : i32
    %c0_i32_1 = arith.constant 0 : i32
    return %c0_i32, %c0_i32_0 : i32, i32
  }
  func.func @transform_2(%arg0: i32) -> (i32, i32) {
    %c0_i32 = arith.constant 0 : i32
    %c0_i32_0 = arith.constant 0 : i32
    %c0_i32_1 = arith.constant 0 : i32
    return %c0_i32, %c0_i32_0 : i32, i32
  }
  func.func @transform_3(%arg0: i32) -> (i32, i32) {
    %c0_i32 = arith.constant 0 : i32
    %c0_i32_0 = arith.constant 0 : i32
    %c0_i32_1 = arith.constant 0 : i32
    return %c0_i32, %c0_i32_0 : i32, i32
  }
  func.func @transform_4(%arg0: i32) -> (i32, i32) {
    %c0_i32 = arith.constant 0 : i32
    %c0_i32_0 = arith.constant 0 : i32
    %c0_i32_1 = arith.constant 0 : i32
    return %c0_i32, %c0_i32_0 : i32, i32
  }
  func.func @transform_5(%arg0: i32) -> (i32, i32) {
    %c0_i32 = arith.constant 0 : i32
    %c0_i32_0 = arith.constant 0 : i32
    %c0_i32_1 = arith.constant 0 : i32
    return %c0_i32, %c0_i32_0 : i32, i32
  }
  func.func @transform_6(%arg0: i32) -> (i32, i32) {
    %c0_i32 = arith.constant 0 : i32
    %c0_i32_0 = arith.constant 0 : i32
    return %c0_i32, %arg0 : i32, i32
  }
}

</mosaic_0001>

<llo_original>
// kernel: tpu_custom_call.1
$region0: #{tpu_custom_call.1}
  #allocation0 [shape = 'u32[]', space=smem, size = 0x4, offset = 0x4, fixed_abs, tag = 'smem constant byte address 0x4 - core index']
  #allocation1 [shape = 'u32[144,128]{1,0:T(1,128)}', space=vmem, size = 0x12000, scoped, tag = 'internal scratch']
  %s0 = inlined_call_operand.vmem [shape: f32[16,8], index: 0, kind: input, shape index: {}]
  %s1 = inlined_call_operand.vmem [shape: f32[8,8], index: 1, kind: input, shape index: {}]
  %s2 = inlined_call_operand.vmem [shape: f32[8,1], index: 2, kind: input, shape index: {}]
  %s3 = inlined_call_operand.vmem [shape: bf16[8,8], index: 3, kind: input, shape index: {}]
  %s4 = inlined_call_operand.vmem [shape: f32[8,1], index: 4, kind: input, shape index: {}]
  %s5 = inlined_call_operand.vmem [shape: f32[1,8], index: 5, kind: input, shape index: {}]
  %s6 = inlined_call_operand.hbm [shape: f32[1,16], index: 6, kind: output, shape index: {}]
  %s7 = sld [smem:[#allocation0]]
  $region34: #{tpu_custom_call.1} parent=0
    _
  %s9 = ssub.s32 1, %s7
  %s10 = scalar_select 0, %s9, %s7
  $region1: #{tpu_custom_call.1} parent=0
    #allocation2 [shape = 'u8[512]{0}', space=vmem, size = 0x400, scoped, tag = 'output window, operand 0, single buffered']
    #allocation3 [shape = 's32[1]{0}', space=sflag, size = 0x4, scoped, tag = 'scoped memory for tpu_custom_call.1']
    %11 = vsyncpa [#allocation3], 0
    // Predicated region
    $region2: #{tpu_custom_call.1} parent=1 // pred_check
      _
    $region3: #{tpu_custom_call.1} parent=1 // pred_check_branch
      %13 = sbr.rel (0) target = $region5
    $region4: #{tpu_custom_call.1} parent=1 // pred_region
      _
    $region5: #{tpu_custom_call.1} parent=1 // pred_fallthru
      _
    // Predicated region
    $region6: #{tpu_custom_call.1} parent=1 // pred_check
      _
    $region7: #{tpu_custom_call.1} parent=1 // pred_check_branch
      %15 = sbr.rel (0) target = $region9
    $region8: #{tpu_custom_call.1} parent=1 // pred_region
      _
    $region9: #{tpu_custom_call.1} parent=1 // pred_fallthru
      _
    // Predicated region
    $region10: #{tpu_custom_call.1} parent=1 // pred_check
      _
    $region11: #{tpu_custom_call.1} parent=1 // pred_check_branch
      %17 = sbr.rel (0) target = $region13
    $region12: #{tpu_custom_call.1} parent=1 // pred_region
      _
    $region13: #{tpu_custom_call.1} parent=1 // pred_fallthru
      _
    // Predicated region
    $region14: #{tpu_custom_call.1} parent=1 // pred_check
      _
    $region15: #{tpu_custom_call.1} parent=1 // pred_check_branch
      %19 = sbr.rel (0) target = $region17
    $region16: #{tpu_custom_call.1} parent=1 // pred_region
      _
    $region17: #{tpu_custom_call.1} parent=1 // pred_fallthru
      _
    // Predicated region
    $region18: #{tpu_custom_call.1} parent=1 // pred_check
      _
    $region19: #{tpu_custom_call.1} parent=1 // pred_check_branch
      %21 = sbr.rel (0) target = $region21
    $region20: #{tpu_custom_call.1} parent=1 // pred_region
      _
    $region21: #{tpu_custom_call.1} parent=1 // pred_fallthru
      _
    // Predicated region
    $region22: #{tpu_custom_call.1} parent=1 // pred_check
      _
    $region23: #{tpu_custom_call.1} parent=1 // pred_check_branch
      %23 = sbr.rel (0) target = $region25
    $region24: #{tpu_custom_call.1} parent=1 // pred_region
      _
    $region25: #{tpu_custom_call.1} parent=1 // pred_fallthru
      _
    %v25 = vld [vmem:[%s1] sm:$0xff]
    %v26 = vld [vmem:[%s0] sm:$0xff]
    %v27 = vld [vmem:[%s0 + $0x8] sm:$0xff]
    %v28 = vld [vmem:[%s0 + $0x10] sm:$0xff]
    %v29 = vld [vmem:[%s0 + $0x18] sm:$0xff]
    %v30 = vld [vmem:[%s0 + $0x20] sm:$0xff]
    %v31 = vld [vmem:[%s0 + $0x28] sm:$0xff]
    %v32 = vld [vmem:[%s0 + $0x30] sm:$0xff]
    %v33 = vld [vmem:[%s0 + $0x38] sm:$0xff]
    %v34 = vld [vmem:[%s0 + $0x40] sm:$0xff]
    %v35 = vld [vmem:[%s0 + $0x48] sm:$0xff]
    %v36 = vld [vmem:[%s0 + $0x50] sm:$0xff]
    %v37 = vld [vmem:[%s0 + $0x58] sm:$0xff]
    %v38 = vld [vmem:[%s0 + $0x60] sm:$0xff]
    %v39 = vld [vmem:[%s0 + $0x68] sm:$0xff]
    %v40 = vld [vmem:[%s0 + $0x70] sm:$0xff]
    %v41 = vld [vmem:[%s0 + $0x78] sm:$0xff]
    %v42 = vld [vmem:[%s2] sm:$0xff]
    %44 = vset.pattern.permute.xlu0 0
    %45 = vperm.xlu0 %44, %v42
    %v46 = vpop.permute.xlu0 %45
    %vm48 = vcmask 64512
    %v50 = vsel %vm48, %v25, 0
    %v53 = vsel %vm48, %v26, 0
    %v56 = vsel %vm48, %v27, 0
    %v59 = vsel %vm48, %v28, 0
    %v62 = vsel %vm48, %v29, 0
    %v65 = vsel %vm48, %v30, 0
    %v68 = vsel %vm48, %v31, 0
    %v71 = vsel %vm48, %v32, 0
    %v74 = vsel %vm48, %v33, 0
    %v77 = vsel %vm48, %v34, 0
    %v80 = vsel %vm48, %v35, 0
    %v83 = vsel %vm48, %v36, 0
    %v86 = vsel %vm48, %v37, 0
    %v89 = vsel %vm48, %v38, 0
    %v92 = vsel %vm48, %v39, 0
    %v95 = vsel %vm48, %v40, 0
    %v98 = vsel %vm48, %v41, 0
    %100 = vmatprep.subr.mxu0 0.0
    %101 = vmatpush1.xpose.msra.mxu0 %v53
    %102 = vmatprep.subr.mxu0 0.0
    %103 = vmatpush1.xpose.msra.mxu0 %v56
    %104 = vmatprep.subr.mxu0 0.0
    %105 = vmatpush1.xpose.msra.mxu0 %v59
    %106 = vmatprep.subr.mxu0 0.0
    %107 = vmatpush1.xpose.msra.mxu0 %v62
    %108 = vmatprep.subr.mxu0 0.0
    %109 = vmatpush1.xpose.msra.mxu0 %v65
    %110 = vmatprep.subr.mxu0 0.0
    %111 = vmatpush1.xpose.msra.mxu0 %v68
    %112 = vmatprep.subr.mxu0 0.0
    %113 = vmatpush1.xpose.msra.mxu0 %v71
    %114 = vmatprep.subr.mxu0 0.0
    %115 = vmatpush1.xpose.msra.mxu0 %v74
    %116 = vmatprep.subr.mxu0 0.0
    %117 = vmatpush1.xpose.msra.mxu0 %v77
    %118 = vmatprep.subr.mxu0 0.0
    %119 = vmatpush1.xpose.msra.mxu0 %v80
    %120 = vmatprep.subr.mxu0 0.0
    %121 = vmatpush1.xpose.msra.mxu0 %v83
    %122 = vmatprep.subr.mxu0 0.0
    %123 = vmatpush1.xpose.msra.mxu0 %v86
    %124 = vmatprep.subr.mxu0 0.0
    %125 = vmatpush1.xpose.msra.mxu0 %v89
    %126 = vmatprep.subr.mxu0 0.0
    %127 = vmatpush1.xpose.msra.mxu0 %v92
    %128 = vmatprep.subr.mxu0 0.0
    %129 = vmatpush1.xpose.msra.mxu0 %v95
    %130 = vmatprep.subr.mxu0 0.0
    %131 = vmatpush1.xpose.msra.mxu0 %v98
    %132 = vmatprep.subr.mxu0 0.0
    %133 = vmatpush1.xpose.msra.mxu0 0.0
    %134 = vmatprep.subr.mxu0 0.0
    %135 = vmatpush1.xpose.msra.mxu0 0.0
    %136 = vmatprep.subr.mxu0 0.0
    %137 = vmatpush1.xpose.msra.mxu0 0.0
    %138 = vmatprep.subr.mxu0 0.0
    %139 = vmatpush1.xpose.msra.mxu0 0.0
    %140 = vmatprep.subr.mxu0 0.0
    %141 = vmatpush1.xpose.msra.mxu0 0.0
    %142 = vmatprep.subr.mxu0 0.0
    %143 = vmatpush1.xpose.msra.mxu0 0.0
    %144 = vmatprep.subr.mxu0 0.0
    %145 = vmatpush1.xpose.msra.mxu0 0.0
    %146 = vmatprep.subr.mxu0 0.0
    %147 = vmatpush1.xpose.msra.mxu0 0.0
    %148 = vmatprep.subr.mxu0 0.0
    %149 = vmatpush1.xpose.msra.mxu0 0.0
    %150 = vmatprep.subr.mxu0 0.0
    %151 = vmatpush1.xpose.msra.mxu0 0.0
    %152 = vmatprep.subr.mxu0 0.0
    %153 = vmatpush1.xpose.msra.mxu0 0.0
    %154 = vmatprep.subr.mxu0 0.0
    %155 = vmatpush1.xpose.msra.mxu0 0.0
    %156 = vmatprep.subr.mxu0 0.0
    %157 = vmatpush1.xpose.msra.mxu0 0.0
    %158 = vmatprep.subr.mxu0 0.0
    %159 = vmatpush1.xpose.msra.mxu0 0.0
    %160 = vmatprep.subr.mxu0 0.0
    %161 = vmatpush1.xpose.msra.mxu0 0.0
    %162 = vmatprep.subr.mxu0 0.0
    %163 = vmatpush1.xpose.msra.mxu0 0.0
    %164 = vmatprep.mubr.f32.mxu0 0.0
    %165 = vmatmul.mubr.f32.gmra.mrb[0].mxu0 %v50
    %v166 = vpop.f32.mrb[0].mxu0
    %v167 = vadd.f32 %v46, %v166
    %v168 = vpop.f32.mrb[0].mxu0
    %169 = vdwg.mxu0
    %vm170 = vcmp.gt.f32.partialorder %v167, 0.0
    %v171 = vsel %vm170, 1, 0
    %v172 = vcvt.s32.f32 %v171
    %v173 = vpack.c.bf16 %v172, %v172
    %v174 = vld [vmem:[%s3] sm:$0xf]
    %v176 = vsel %vm48, %v174, 0
    %vm178 = vcmask 1043456
    %v180 = vsel %vm178, %v173, 0
    %182 = vmatprep.subr.bf16.mxu0 0
    %183 = vmatpush1.bf16.msra.mxu0 %v180
    %184 = vmatprep.subr.bf16.mxu0 0
    %185 = vmatpush1.bf16.msra.mxu0 0
    %186 = vmatprep.subr.bf16.mxu0 0
    %187 = vmatpush1.bf16.msra.mxu0 0
    %188 = vmatprep.subr.bf16.mxu0 0
    %189 = vmatpush1.bf16.msra.mxu0 0
    %190 = vmatprep.subr.bf16.mxu0 0
    %191 = vmatpush1.bf16.msra.mxu0 0
    %192 = vmatprep.subr.bf16.mxu0 0
    %193 = vmatpush1.bf16.msra.mxu0 0
    %194 = vmatprep.subr.bf16.mxu0 0
    %195 = vmatpush1.bf16.msra.mxu0 0
    %196 = vmatprep.subr.bf16.mxu0 0
    %197 = vmatpush1.bf16.msra.mxu0 0
    %198 = vmatprep.subr.bf16.mxu0 0
    %199 = vmatpush1.bf16.msra.mxu0 0
    %200 = vmatprep.subr.bf16.mxu0 0
    %201 = vmatpush1.bf16.msra.mxu0 0
    %202 = vmatprep.subr.bf16.mxu0 0
    %203 = vmatpush1.bf16.msra.mxu0 0
    %204 = vmatprep.subr.bf16.mxu0 0
    %205 = vmatpush1.bf16.msra.mxu0 0
    %206 = vmatprep.subr.bf16.mxu0 0
    %207 = vmatpush1.bf16.msra.mxu0 0
    %208 = vmatprep.subr.bf16.mxu0 0
    %209 = vmatpush1.bf16.msra.mxu0 0
    %210 = vmatprep.subr.bf16.mxu0 0
    %211 = vmatpush1.bf16.msra.mxu0 0
    %212 = vmatprep.subr.bf16.mxu0 0
    %213 = vmatpush1.bf16.msra.mxu0 0
    %214 = vmatprep.mubr.bf16.mxu0 0
    %215 = vmatmul.mubr.bf16.gmra.mrb[0].mxu0 %v176
    %v216 = vpop.f32.mrb[0].mxu0
    %v217 = vadd.f32 0.0, %v216
    %v218 = vpop.f32.mrb[0].mxu0
    %v219 = vpop.f32.mrb[0].mxu0
    %v220 = vpop.f32.mrb[0].mxu0
    %221 = vdwg.mxu0
    %v222 = vld [vmem:[%s4] sm:$0xff]
    %224 = vset.pattern.permute.xlu0 0
    %225 = vperm.xlu0 %224, %v222
    %v226 = vpop.permute.xlu0 %225
    %vm228 = vcmp.gt.f32.partialorder %v217, %v226
    %v229 = vsel %vm228, 1, 0
    %v230 = vcvt.s32.f32 %v229
    %v231 = vld [vmem:[%s5] sm:$0x1]
    %v233 = vsel %vm48, %v231, 0
    %235 = vmatprep.subr.mxu0 0.0
    %236 = vmatpush1.msra.mxu0 %v230
    %237 = vmatprep.subr.mxu0 0.0
    %238 = vmatpush1.msra.mxu0 0.0
    %239 = vmatprep.subr.mxu0 0.0
    %240 = vmatpush1.msra.mxu0 0.0
    %241 = vmatprep.subr.mxu0 0.0
    %242 = vmatpush1.msra.mxu0 0.0
    %243 = vmatprep.subr.mxu0 0.0
    %244 = vmatpush1.msra.mxu0 0.0
    %245 = vmatprep.subr.mxu0 0.0
    %246 = vmatpush1.msra.mxu0 0.0
    %247 = vmatprep.subr.mxu0 0.0
    %248 = vmatpush1.msra.mxu0 0.0
    %249 = vmatprep.subr.mxu0 0.0
    %250 = vmatpush1.msra.mxu0 0.0
    %251 = vmatprep.subr.mxu0 0.0
    %252 = vmatpush1.msra.mxu0 0.0
    %253 = vmatprep.subr.mxu0 0.0
    %254 = vmatpush1.msra.mxu0 0.0
    %255 = vmatprep.subr.mxu0 0.0
    %256 = vmatpush1.msra.mxu0 0.0
    %257 = vmatprep.subr.mxu0 0.0
    %258 = vmatpush1.msra.mxu0 0.0
    %259 = vmatprep.subr.mxu0 0.0
    %260 = vmatpush1.msra.mxu0 0.0
    %261 = vmatprep.subr.mxu0 0.0
    %262 = vmatpush1.msra.mxu0 0.0
    %263 = vmatprep.subr.mxu0 0.0
    %264 = vmatpush1.msra.mxu0 0.0
    %265 = vmatprep.subr.mxu0 0.0
    %266 = vmatpush1.msra.mxu0 0.0
    %267 = vmatprep.subr.mxu0 0.0
    %268 = vmatpush1.msra.mxu0 0.0
    %269 = vmatprep.subr.mxu0 0.0
    %270 = vmatpush1.msra.mxu0 0.0
    %271 = vmatprep.subr.mxu0 0.0
    %272 = vmatpush1.msra.mxu0 0.0
    %273 = vmatprep.subr.mxu0 0.0
    %274 = vmatpush1.msra.mxu0 0.0
    %275 = vmatprep.subr.mxu0 0.0
    %276 = vmatpush1.msra.mxu0 0.0
    %277 = vmatprep.subr.mxu0 0.0
    %278 = vmatpush1.msra.mxu0 0.0
    %279 = vmatprep.subr.mxu0 0.0
    %280 = vmatpush1.msra.mxu0 0.0
    %281 = vmatprep.subr.mxu0 0.0
    %282 = vmatpush1.msra.mxu0 0.0
    %283 = vmatprep.subr.mxu0 0.0
    %284 = vmatpush1.msra.mxu0 0.0
    %285 = vmatprep.subr.mxu0 0.0
    %286 = vmatpush1.msra.mxu0 0.0
    %287 = vmatprep.subr.mxu0 0.0
    %288 = vmatpush1.msra.mxu0 0.0
    %289 = vmatprep.subr.mxu0 0.0
    %290 = vmatpush1.msra.mxu0 0.0
    %291 = vmatprep.subr.mxu0 0.0
    %292 = vmatpush1.msra.mxu0 0.0
    %293 = vmatprep.subr.mxu0 0.0
    %294 = vmatpush1.msra.mxu0 0.0
    %295 = vmatprep.subr.mxu0 0.0
    %296 = vmatpush1.msra.mxu0 0.0
    %297 = vmatprep.subr.mxu0 0.0
    %298 = vmatpush1.msra.mxu0 0.0
    %299 = vmatprep.mubr.f32.mxu0 0.0
    %300 = vmatmul.mubr.f32.gmra.mrb[0].mxu0 %v233
    %v301 = vpop.f32.mrb[0].mxu0
    %v302 = vadd.f32 0.0, %v301
    %v303 = vpop.f32.mrb[0].mxu0
    %304 = vdwg.mxu0
    %305 = vst [vmem:[#allocation2] sm:$0x1] %v302
    // Predicated region
    $region26: #{tpu_custom_call.1} parent=1 // pred_check
      _
    $region27: #{tpu_custom_call.1} parent=1 // pred_check_branch
      %307 = sbr.rel (0) target = $region29
    $region28: #{tpu_custom_call.1} parent=1 // pred_region
      %s309 = ssub.s32 16, 16
      %310 = vsyncadd [#allocation3], %s309
      %s312 = sshll.u32 [#allocation2], 4
      %s313 = int_to_ptr.vmem [resolvable:$true] %s312
      %315 = dma.vmem_to_hbm [thread:$0]  %s313, 16, %s6, [#allocation3]
    $region29: #{tpu_custom_call.1} parent=1 // pred_fallthru
      _
    // Predicated region
    $region30: #{tpu_custom_call.1} parent=1 // pred_check
      _
    $region31: #{tpu_custom_call.1} parent=1 // pred_check_branch
      %317 = sbr.rel (0) target = $region33
    $region32: #{tpu_custom_call.1} parent=1 // pred_region
      %318 = dma.done [#allocation3], 16
    $region33: #{tpu_custom_call.1} parent=1 // pred_fallthru
      _
    %319 = vsyncpa [#allocation3], 1

</llo_original>
